<compile_context>
chip_gen: v5e
topology: v5e:2x2
jax: 0.10.0
libtpu: 0.0.40
codegen_flags: <defaults>
</compile_context>

<pallas_src>
import functools

import jax
import jax.numpy as jnp
from jax.experimental import pallas as pl
from jax.experimental.pallas import tpu as pltpu

LANE = 128
SUBLANE = 8
CHUNK_ROWS = 256                       # rows per inner accumulation step
TARGET_TILE_BYTES = 4 * 1024 * 1024    # per input, per pipeline buffer
VMEM_LIMIT_BYTES = 40 * 1024 * 1024    # fits v7x (64 MiB) and v5e/v6e (128 MiB)


def _round_up(x, m):
    return (x + m - 1) // m * m


def _cdiv(a, b):
    return (a + b - 1) // b


def _multi_tensorcore_chip():
    """Conservative detection of a 2-TensorCore-per-chip TPU (v7x-like)."""
    try:
        kind = jax.devices()[0].device_kind.lower()
    except Exception:
        return False
    return ("v7" in kind) or ("7x" in kind)


def _bce_dice_partials_kernel(p_ref, t_ref, acc_ref, *, tile_rows, chunk_rows,
                              tiles_per_core, total_rows, apply_sigmoid,
                              needs_mask, neutral_pred):
    """Accumulate 4 lane-shaped partial sums into the resident output block.

    acc_ref block: (1, 4, 8, 128) f32, resident across the 'arbitrary' axis.
      [0,0] BCE-term partials, [0,1] sum(p*t), [0,2] sum(p), [0,3] sum(t)
    """
    c = pl.program_id(0)
    i = pl.program_id(1)

    @pl.when(i == 0)
    def _init():
        acc_ref[...] = jnp.zeros_like(acc_ref)

    num_chunks = tile_rows // chunk_rows
    row0 = (c * tiles_per_core + i) * tile_rows   # logical first row of this tile

    def chunk_partials(x, t):
        # x, t: (chunk_rows, LANE) float32
        if apply_sigmoid:
            p = jax.nn.sigmoid(x)
            log_p = jnp.maximum(-jax.nn.softplus(-x), -100.0)
            log_1mp = jnp.maximum(-jax.nn.softplus(x), -100.0)
        else:
            p = x
            # nn.BCELoss clamps each log at -100.
            log_p = jnp.maximum(jnp.log(p), -100.0)
            log_1mp = jnp.maximum(jnp.log1p(-p), -100.0)
        # Refactored BCE element (one fewer multiply):
        #   -(t*log p + (1-t)*log(1-p)) == -(log(1-p) + t*(log p - log(1-p)))
        bce = -(log_1mp + t * (log_p - log_1mp))
        inter = p * t

        def fold(v):
            # (chunk_rows,128) -> (8,128): cross-vreg VPU adds only, no XLU.
            return jnp.sum(v.reshape(-1, SUBLANE, LANE), axis=0)

        return fold(bce), fold(inter), fold(p), fold(t)

    def accumulate(masked):
        def body(k, carry):
            sb, si, sp, st = carry
            off = pl.multiple_of(k * chunk_rows, chunk_rows)
            x = p_ref[pl.ds(off, chunk_rows), :].astype(jnp.float32)
            t = t_ref[pl.ds(off, chunk_rows), :].astype(jnp.float32)
            if masked:
                # Mask BEFORE any log so invalid rows contribute exactly 0
                # (neutral_pred is chosen so bce/inter/p/t terms all vanish).
                ridx = row0 + off + jax.lax.broadcasted_iota(jnp.int32, x.shape, 0)
                valid = ridx < total_rows
                x = jnp.where(valid, x, neutral_pred)
                t = jnp.where(valid, t, 0.0)
            fb, fi, fp, ft = chunk_partials(x, t)
            return (sb + fb, si + fi, sp + fp, st + ft)

        init = tuple(jnp.zeros((SUBLANE, LANE), jnp.float32) for _ in range(4))
        sb, si, sp, st = jax.lax.fori_loop(
            0, num_chunks, body, init, unroll=2 if num_chunks > 1 else 1)
        acc_ref[0, 0, :, :] += sb
        acc_ref[0, 1, :, :] += si
        acc_ref[0, 2, :, :] += sp
        acc_ref[0, 3, :, :] += st

    if not needs_mask:
        accumulate(masked=False)
    else:
        # Only the final overshoot tile pays the mask; steady-state tiles run
        # the unmasked body.
        @pl.when(row0 + tile_rows <= total_rows)
        def _clean():
            accumulate(masked=False)

        @pl.when(row0 + tile_rows > total_rows)
        def _masked():
            accumulate(masked=True)


def bce_dice_loss(logits, target, activation="none", eps=1e-7):
    if activation == "sigmoid":
        apply_sigmoid = True
    elif activation == "none":
        apply_sigmoid = False
    else:
        # TODO(synk): other get_activation_func options (e.g. softmax2d) not implemented.
        raise ValueError(f"unsupported activation: {activation}")

    # Keep native dtypes (bf16 preds, bf16/int8/bool targets stream as-is);
    # the cast to f32 happens in-kernel on the VMEM chunk.
    p = logits.reshape(-1)
    t = target.reshape(-1)
    n = p.shape[0]

    # Neutral prediction value: padded / masked elements contribute exactly 0
    # to all four sums (with t padded to 0).
    neutral_pred = -30000.0 if apply_sigmoid else 0.0

    n_pad = _round_up(n, SUBLANE * LANE)
    if n_pad != n:
        p = jnp.pad(p, (0, n_pad - n), constant_values=neutral_pred)
        t = jnp.pad(t, (0, n_pad - n))
    rows = n_pad // LANE
    p2d = p.reshape(rows, LANE)
    t2d = t.reshape(rows, LANE)

    # Tile sizing: ~4 MiB per input per pipeline buffer (8192 rows f32,
    # 16384 rows bf16), multiple of the inner chunk size.
    itemsize = max(p2d.dtype.itemsize, t2d.dtype.itemsize)
    target_tile_rows = max(
        CHUNK_ROWS, (TARGET_TILE_BYTES // (LANE * itemsize)) // SUBLANE * SUBLANE)

    # Only split across TensorCores on multi-TC chips (v7x) and only when each
    # core gets at least a full tile; v5e/v6e always use a single range.
    num_cores = 2 if (_multi_tensorcore_chip() and rows >= 2 * target_tile_rows) else 1

    rows_per_core = _cdiv(rows, num_cores)
    tile_rows = min(target_tile_rows, _round_up(rows_per_core, SUBLANE))
    chunk_rows = min(CHUNK_ROWS, tile_rows)
    tile_rows = _round_up(tile_rows, chunk_rows)

    num_blocks = _cdiv(rows, tile_rows)
    tiles_per_core = _cdiv(num_blocks, num_cores)
    covered_rows = num_cores * tiles_per_core * tile_rows
    needs_mask = covered_rows != rows          # grid overshoot -> mask last tile(s)
    last_block = num_blocks - 1

    def in_index_map(c, i):
        b = c * tiles_per_core + i
        # Clamp so overshoot tiles never address past the last block; the
        # in-kernel mask zeroes their contribution anyway.
        return (jnp.minimum(b, last_block), 0)

    kernel = functools.partial(
        _bce_dice_partials_kernel,
        tile_rows=tile_rows,
        chunk_rows=chunk_rows,
        tiles_per_core=tiles_per_core,
        total_rows=rows,
        apply_sigmoid=apply_sigmoid,
        needs_mask=needs_mask,
        neutral_pred=neutral_pred,
    )

    core_sem = pltpu.CORE_PARALLEL if num_cores > 1 else pltpu.ARBITRARY

    partials = pl.pallas_call(
        kernel,
        out_shape=jax.ShapeDtypeStruct((num_cores, 4, SUBLANE, LANE), jnp.float32),
        grid=(num_cores, tiles_per_core),
        in_specs=[
            pl.BlockSpec((tile_rows, LANE), in_index_map),
            pl.BlockSpec((tile_rows, LANE), in_index_map),
        ],
        out_specs=pl.BlockSpec((1, 4, SUBLANE, LANE), lambda c, i: (c, 0, 0, 0)),
        compiler_params=pltpu.CompilerParams(
            dimension_semantics=(core_sem, pltpu.ARBITRARY),
            vmem_limit_bytes=VMEM_LIMIT_BYTES,
        ),
        cost_estimate=pl.CostEstimate(
            flops=12 * n,
            transcendentals=(3 if apply_sigmoid else 2) * n,
            bytes_accessed=n * (p2d.dtype.itemsize + t2d.dtype.itemsize)
            + num_cores * 4 * SUBLANE * LANE * 4),
    )(p2d, t2d)

    # Single cross-lane reduction, once, outside the hot loop.
    sums = jnp.sum(partials, axis=(0, 2, 3))        # (4,)
    bce = sums[0] / n
    dice = 2.0 * sums[1] / (sums[2] + sums[3] + eps)
    return bce - jnp.log(dice + 1e-6)


def _reference(logits, target, activation="none", eps=1e-7):
    x = logits.astype(jnp.float32)
    p = jax.nn.sigmoid(x) if activation == "sigmoid" else x
    t = target.astype(jnp.float32)
    log_p = jnp.maximum(jnp.log(p), -100.0)
    log_1mp = jnp.maximum(jnp.log(1.0 - p), -100.0)
    bce = jnp.mean(-(t * log_p + (1.0 - t) * log_1mp))
    dice = 2.0 * jnp.sum(p * t) / (jnp.sum(p) + jnp.sum(t) + eps)
    return bce - jnp.log(dice + 1e-6)


if __name__ == "__main__":
    key = jax.random.PRNGKey(0)
    k1, k2, k3 = jax.random.split(key, 3)

    # NCHW, small shapes.  With activation='none' the BCE input must already
    # be a probability, so draw "logits" in (0.05, 0.95).
    logits = jax.random.uniform(k1, (2, 4, 16, 16), jnp.float32,
                                minval=0.05, maxval=0.95)
    target = (jax.random.uniform(k2, (2, 4, 16, 16), jnp.float32) < 0.5
              ).astype(jnp.float32)

    loss = jax.block_until_ready(bce_dice_loss(logits, target, activation="none"))
    ref = _reference(logits, target, activation="none")
    assert jnp.allclose(loss, ref, rtol=1e-4, atol=1e-5), (loss, ref)

    # Fused-sigmoid path on raw logits.
    raw = jax.random.normal(k3, (2, 4, 16, 16), jnp.float32)
    loss_s = jax.block_until_ready(bce_dice_loss(raw, target, activation="sigmoid"))
    ref_s = _reference(raw, target, activation="sigmoid")
    assert jnp.allclose(loss_s, ref_s, rtol=1e-4, atol=1e-5), (loss_s, ref_s)

    print("KERNEL_OK")
</pallas_src>

<mosaic_0001>
module attributes {stable_mosaic.version = 11 : i64} {
  func.func @_bce_dice_partials_kernel(%arg0: i32, %arg1: i32, %arg2: memref<16x128xf32, #tpu.memory_space<vmem>>, %arg3: memref<16x128xf32, #tpu.memory_space<vmem>>, %arg4: memref<1x4x8x128xf32, #tpu.memory_space<vmem>>) attributes {dimension_semantics = [#tpu.dimension_semantics<arbitrary>, #tpu.dimension_semantics<arbitrary>], iteration_bounds = array<i64: 1, 1>, scalar_prefetch = 0 : i64, scratch_operands = 0 : i64, tpu.core_type = #tpu.core_type<tc>, window_params = [{transform_indices = @transform_0, window_bounds = array<i64: 16, 128>}, {transform_indices = @transform_1, window_bounds = array<i64: 16, 128>}, {transform_indices = @transform_2, window_bounds = array<i64: 1, 4, 8, 128>}]} {
    %c0_i32 = arith.constant 0 : i32
    %0 = arith.cmpi eq, %arg1, %c0_i32 : i32
    %1 = arith.extui %0 : i1 to i32
    %c0_i32_0 = arith.constant 0 : i32
    %2 = arith.cmpi ne, %1, %c0_i32_0 : i32
    scf.if %2 {
      %cst_43 = arith.constant 0.000000e+00 : f32
      %63 = vector.broadcast %cst_43 : f32 to vector<1x4x8x128xf32>
      %c0_44 = arith.constant 0 : index
      %c0_45 = arith.constant 0 : index
      %c0_46 = arith.constant 0 : index
      %c0_47 = arith.constant 0 : index
      %64 = vector.load %arg4[%c0_44, %c0_45, %c0_46, %c0_47] : memref<1x4x8x128xf32, #tpu.memory_space<vmem>>, vector<1x4x8x128xf32>
      tpu.vector_store %arg4[%c0_44, %c0_45, %c0_46, %c0_47], %63 {strides = array<i32>} : memref<1x4x8x128xf32, #tpu.memory_space<vmem>>, vector<1x4x8x128xf32>,
    } else {
    }
    %cst = arith.constant 0.000000e+00 : f32
    %3 = vector.broadcast %cst : f32 to vector<8x128xf32>
    %cst_1 = arith.constant 0.000000e+00 : f32
    %4 = vector.broadcast %cst_1 : f32 to vector<8x128xf32>
    %cst_2 = arith.constant 0.000000e+00 : f32
    %5 = vector.broadcast %cst_2 : f32 to vector<8x128xf32>
    %cst_3 = arith.constant 0.000000e+00 : f32
    %6 = vector.broadcast %cst_3 : f32 to vector<8x128xf32>
    %c0_i32_4 = arith.constant 0 : i32
    %c16_i32 = arith.constant 16 : i32
    %7 = arith.muli %c0_i32_4, %c16_i32 : i32
    %8 = tpu.assume_multiple %7, 16 : i32
    %9 = arith.index_cast %8 : i32 to index
    %c0 = arith.constant 0 : index
    %10 = vector.load %arg2[%9, %c0] : memref<16x128xf32, #tpu.memory_space<vmem>>, vector<16x128xf32>
    %11 = arith.index_cast %8 : i32 to index
    %c0_5 = arith.constant 0 : index
    %12 = vector.load %arg3[%11, %c0_5] : memref<16x128xf32, #tpu.memory_space<vmem>>, vector<16x128xf32>
    %13 = math.log %10 : vector<16x128xf32>
    %cst_6 = arith.constant -1.000000e+02 : f32
    %14 = vector.broadcast %cst_6 : f32 to vector<16x128xf32>
    %15 = arith.maximumf %13, %14 : vector<16x128xf32>
    %cst_7 = arith.constant 0.000000e+00 : f32
    %16 = vector.broadcast %cst_7 : f32 to vector<16x128xf32>
    %17 = arith.subf %16, %10 : vector<16x128xf32>
    %18 = math.log1p %17 : vector<16x128xf32>
    %cst_8 = arith.constant -1.000000e+02 : f32
    %19 = vector.broadcast %cst_8 : f32 to vector<16x128xf32>
    %20 = arith.maximumf %18, %19 : vector<16x128xf32>
    %21 = arith.subf %15, %20 : vector<16x128xf32>
    %22 = arith.mulf %12, %21 : vector<16x128xf32>
    %23 = arith.addf %20, %22 : vector<16x128xf32>
    %cst_9 = arith.constant 0.000000e+00 : f32
    %24 = vector.broadcast %cst_9 : f32 to vector<16x128xf32>
    %25 = arith.subf %24, %23 : vector<16x128xf32>
    %26 = arith.mulf %10, %12 : vector<16x128xf32>
    %27 = vector.shape_cast %25 : vector<16x128xf32> to vector<2x8x128xf32>
    %cst_10 = arith.constant dense<0.000000e+00> : vector<8x128xf32>
    %28 = vector.multi_reduction <add>, %27, %cst_10 [0] : vector<2x8x128xf32> to vector<8x128xf32>
    %29 = vector.shape_cast %26 : vector<16x128xf32> to vector<2x8x128xf32>
    %cst_11 = arith.constant dense<0.000000e+00> : vector<8x128xf32>
    %30 = vector.multi_reduction <add>, %29, %cst_11 [0] : vector<2x8x128xf32> to vector<8x128xf32>
    %31 = vector.shape_cast %10 : vector<16x128xf32> to vector<2x8x128xf32>
    %cst_12 = arith.constant dense<0.000000e+00> : vector<8x128xf32>
    %32 = vector.multi_reduction <add>, %31, %cst_12 [0] : vector<2x8x128xf32> to vector<8x128xf32>
    %33 = vector.shape_cast %12 : vector<16x128xf32> to vector<2x8x128xf32>
    %cst_13 = arith.constant dense<0.000000e+00> : vector<8x128xf32>
    %34 = vector.multi_reduction <add>, %33, %cst_13 [0] : vector<2x8x128xf32> to vector<8x128xf32>
    %35 = arith.addf %3, %28 : vector<8x128xf32>
    %36 = arith.addf %4, %30 : vector<8x128xf32>
    %37 = arith.addf %5, %32 : vector<8x128xf32>
    %38 = arith.addf %6, %34 : vector<8x128xf32>
    %c1_i32 = arith.constant 1 : i32
    %c0_14 = arith.constant 0 : index
    %c0_15 = arith.constant 0 : index
    %c0_16 = arith.constant 0 : index
    %c0_17 = arith.constant 0 : index
    %39 = vector.load %arg4[%c0_14, %c0_15, %c0_16, %c0_17] : memref<1x4x8x128xf32, #tpu.memory_space<vmem>>, vector<1x1x8x128xf32>
    %40 = vector.shape_cast %39 : vector<1x1x8x128xf32> to vector<8x128xf32>
    %41 = arith.addf %40, %35 : vector<8x128xf32>
    %c0_18 = arith.constant 0 : index
    %c0_19 = arith.constant 0 : index
    %c0_20 = arith.constant 0 : index
    %c0_21 = arith.constant 0 : index
    %42 = vector.load %arg4[%c0_18, %c0_19, %c0_20, %c0_21] : memref<1x4x8x128xf32, #tpu.memory_space<vmem>>, vector<1x1x8x128xf32>
    %43 = vector.shape_cast %42 : vector<1x1x8x128xf32> to vector<8x128xf32>
    %44 = vector.shape_cast %41 : vector<8x128xf32> to vector<1x1x8x128xf32>
    tpu.vector_store %arg4[%c0_18, %c0_19, %c0_20, %c0_21], %44 {strides = array<i32>} : memref<1x4x8x128xf32, #tpu.memory_space<vmem>>, vector<1x1x8x128xf32>,
    %c0_22 = arith.constant 0 : index
    %c1 = arith.constant 1 : index
    %c0_23 = arith.constant 0 : index
    %c0_24 = arith.constant 0 : index
    %45 = vector.load %arg4[%c0_22, %c1, %c0_23, %c0_24] : memref<1x4x8x128xf32, #tpu.memory_space<vmem>>, vector<1x1x8x128xf32>
    %46 = vector.shape_cast %45 : vector<1x1x8x128xf32> to vector<8x128xf32>
    %47 = arith.addf %46, %36 : vector<8x128xf32>
    %c0_25 = arith.constant 0 : index
    %c1_26 = arith.constant 1 : index
    %c0_27 = arith.constant 0 : index
    %c0_28 = arith.constant 0 : index
    %48 = vector.load %arg4[%c0_25, %c1_26, %c0_27, %c0_28] : memref<1x4x8x128xf32, #tpu.memory_space<vmem>>, vector<1x1x8x128xf32>
    %49 = vector.shape_cast %48 : vector<1x1x8x128xf32> to vector<8x128xf32>
    %50 = vector.shape_cast %47 : vector<8x128xf32> to vector<1x1x8x128xf32>
    tpu.vector_store %arg4[%c0_25, %c1_26, %c0_27, %c0_28], %50 {strides = array<i32>} : memref<1x4x8x128xf32, #tpu.memory_space<vmem>>, vector<1x1x8x128xf32>,
    %c0_29 = arith.constant 0 : index
    %c2 = arith.constant 2 : index
    %c0_30 = arith.constant 0 : index
    %c0_31 = arith.constant 0 : index
    %51 = vector.load %arg4[%c0_29, %c2, %c0_30, %c0_31] : memref<1x4x8x128xf32, #tpu.memory_space<vmem>>, vector<1x1x8x128xf32>
    %52 = vector.shape_cast %51 : vector<1x1x8x128xf32> to vector<8x128xf32>
    %53 = arith.addf %52, %37 : vector<8x128xf32>
    %c0_32 = arith.constant 0 : index
    %c2_33 = arith.constant 2 : index
    %c0_34 = arith.constant 0 : index
    %c0_35 = arith.constant 0 : index
    %54 = vector.load %arg4[%c0_32, %c2_33, %c0_34, %c0_35] : memref<1x4x8x128xf32, #tpu.memory_space<vmem>>, vector<1x1x8x128xf32>
    %55 = vector.shape_cast %54 : vector<1x1x8x128xf32> to vector<8x128xf32>
    %56 = vector.shape_cast %53 : vector<8x128xf32> to vector<1x1x8x128xf32>
    tpu.vector_store %arg4[%c0_32, %c2_33, %c0_34, %c0_35], %56 {strides = array<i32>} : memref<1x4x8x128xf32, #tpu.memory_space<vmem>>, vector<1x1x8x128xf32>,
    %c0_36 = arith.constant 0 : index
    %c3 = arith.constant 3 : index
    %c0_37 = arith.constant 0 : index
    %c0_38 = arith.constant 0 : index
    %57 = vector.load %arg4[%c0_36, %c3, %c0_37, %c0_38] : memref<1x4x8x128xf32, #tpu.memory_space<vmem>>, vector<1x1x8x128xf32>
    %58 = vector.shape_cast %57 : vector<1x1x8x128xf32> to vector<8x128xf32>
    %59 = arith.addf %58, %38 : vector<8x128xf32>
    %c0_39 = arith.constant 0 : index
    %c3_40 = arith.constant 3 : index
    %c0_41 = arith.constant 0 : index
    %c0_42 = arith.constant 0 : index
    %60 = vector.load %arg4[%c0_39, %c3_40, %c0_41, %c0_42] : memref<1x4x8x128xf32, #tpu.memory_space<vmem>>, vector<1x1x8x128xf32>
    %61 = vector.shape_cast %60 : vector<1x1x8x128xf32> to vector<8x128xf32>
    %62 = vector.shape_cast %59 : vector<8x128xf32> to vector<1x1x8x128xf32>
    tpu.vector_store %arg4[%c0_39, %c3_40, %c0_41, %c0_42], %62 {strides = array<i32>} : memref<1x4x8x128xf32, #tpu.memory_space<vmem>>, vector<1x1x8x128xf32>,
    return
  }
  func.func @transform_0(%arg0: i32, %arg1: i32) -> (i32, i32) {
    %c1_i32 = arith.constant 1 : i32
    %0 = arith.muli %arg0, %c1_i32 : i32
    %1 = arith.addi %0, %arg1 : i32
    %c0_i32 = arith.constant 0 : i32
    %2 = arith.minsi %1, %c0_i32 : i32
    %c0_i32_0 = arith.constant 0 : i32
    %c0_i32_1 = arith.constant 0 : i32
    return %2, %c0_i32_0 : i32, i32
  }
  func.func @transform_1(%arg0: i32, %arg1: i32) -> (i32, i32) {
    %c1_i32 = arith.constant 1 : i32
    %0 = arith.muli %arg0, %c1_i32 : i32
    %1 = arith.addi %0, %arg1 : i32
    %c0_i32 = arith.constant 0 : i32
    %2 = arith.minsi %1, %c0_i32 : i32
    %c0_i32_0 = arith.constant 0 : i32
    %c0_i32_1 = arith.constant 0 : i32
    return %2, %c0_i32_0 : i32, i32
  }
  func.func @transform_2(%arg0: i32, %arg1: i32) -> (i32, i32, i32, i32) {
    %c0_i32 = arith.constant 0 : i32
    %c0_i32_0 = arith.constant 0 : i32
    %c0_i32_1 = arith.constant 0 : i32
    %c0_i32_2 = arith.constant 0 : i32
    return %arg0, %c0_i32, %c0_i32_0, %c0_i32_1 : i32, i32, i32, i32
  }
}

</mosaic_0001>

<llo_original>
// kernel: tpu_custom_call.1
$region0: #{tpu_custom_call.1}
  #allocation0 [shape = 'u32[]', space=smem, size = 0x4, offset = 0x4, fixed_abs, tag = 'smem constant byte address 0x4 - core index']
  #allocation1 [shape = 'u32[72,128]{1,0:T(1,128)}', space=vmem, size = 0x9000, scoped, tag = 'internal scratch']
  %s0 = inlined_call_operand.hbm [shape: f32[16,128], index: 0, kind: input, shape index: {}]
  %s1 = inlined_call_operand.hbm [shape: f32[16,128], index: 1, kind: input, shape index: {}]
  %s2 = inlined_call_operand.hbm [shape: f32[1,4,8,128], index: 2, kind: output, shape index: {}]
  %s3 = sld [smem:[#allocation0]]
  $region30: #{tpu_custom_call.1} parent=0
    _
  %s5 = ssub.s32 1, %s3
  %s6 = scalar_select 0, %s5, %s3
  $region1: #{tpu_custom_call.1} parent=0
    #allocation2 [shape = 'u8[8192]{0}', space=vmem, size = 0x2000, scoped, tag = 'input window, operand 0, single buffered']
    #allocation3 [shape = 's32[1]{0}', space=sflag, size = 0x4, scoped, tag = 'scoped memory for tpu_custom_call.1']
    #allocation4 [shape = 's32[1]{0}', space=sflag, size = 0x4, scoped, tag = 'scoped memory for tpu_custom_call.1']
    #allocation5 [shape = 'u8[8192]{0}', space=vmem, size = 0x2000, scoped, tag = 'input window, operand 1, single buffered']
    #allocation6 [shape = 's32[1]{0}', space=sflag, size = 0x4, scoped, tag = 'scoped memory for tpu_custom_call.1']
    #allocation7 [shape = 'u8[16384]{0}', space=vmem, size = 0x4000, scoped, tag = 'output window, operand 0, single buffered']
    %7 = vsyncpa [#allocation3], 0
    %8 = vsyncpa [#allocation6], 0
    %9 = vsyncpa [#allocation4], 0
    // Predicated region
    $region2: #{tpu_custom_call.1} parent=1 // pred_check
      _
    $region3: #{tpu_custom_call.1} parent=1 // pred_check_branch
      %11 = sbr.rel (0) target = $region5
    $region4: #{tpu_custom_call.1} parent=1 // pred_region
      %s12 = sadd.s32 0, 0
      %p13 = scmp.lt.s32.totalorder %s12, 0
      %s14 = scalar_select %p13, %s12, 0
      %s15 = smul.u32 2, %s14
      %17 = vsyncadd [#allocation3], 0
      %s18 = smul.addr %s15, 8
      %s19 = scalar_lea.hbm %s0, %s18
      %s20 = sshll.u32 %s19, 4
      %s21 = int_to_ptr.hbm [resolvable:$true] %s20
      %s22 = sshll.u32 [#allocation2], 4
      %s23 = int_to_ptr.vmem [resolvable:$true] %s22
      %28 = dma.hbm_to_vmem [thread:$0]  %s21, 256, %s23, [#allocation3], 128, 128, 8
    $region5: #{tpu_custom_call.1} parent=1 // pred_fallthru
      _
    // Predicated region
    $region6: #{tpu_custom_call.1} parent=1 // pred_check
      _
    $region7: #{tpu_custom_call.1} parent=1 // pred_check_branch
      %30 = sbr.rel (0) target = $region9
    $region8: #{tpu_custom_call.1} parent=1 // pred_region
      %s31 = sadd.s32 0, 0
      %p32 = scmp.lt.s32.totalorder %s31, 0
      %s33 = scalar_select %p32, %s31, 0
      %s34 = smul.u32 2, %s33
      %36 = vsyncadd [#allocation6], 0
      %s37 = smul.addr %s34, 8
      %s38 = scalar_lea.hbm %s1, %s37
      %s39 = sshll.u32 %s38, 4
      %s40 = int_to_ptr.hbm [resolvable:$true] %s39
      %s41 = sshll.u32 [#allocation5], 4
      %s42 = int_to_ptr.vmem [resolvable:$true] %s41
      %47 = dma.hbm_to_vmem [thread:$0]  %s40, 256, %s42, [#allocation6], 128, 128, 8
    $region9: #{tpu_custom_call.1} parent=1 // pred_fallthru
      _
    // Predicated region
    $region10: #{tpu_custom_call.1} parent=1 // pred_check
      _
    $region11: #{tpu_custom_call.1} parent=1 // pred_check_branch
      %49 = sbr.rel (0) target = $region13
    $region12: #{tpu_custom_call.1} parent=1 // pred_region
      %51 = dma.done [#allocation3], 256
    $region13: #{tpu_custom_call.1} parent=1 // pred_fallthru
      _
    // Predicated region
    $region14: #{tpu_custom_call.1} parent=1 // pred_check
      _
    $region15: #{tpu_custom_call.1} parent=1 // pred_check_branch
      %53 = sbr.rel (0) target = $region17
    $region16: #{tpu_custom_call.1} parent=1 // pred_region
      %55 = dma.done [#allocation6], 256
    $region17: #{tpu_custom_call.1} parent=1 // pred_fallthru
      _
    %s56 = sadd.s32 0, 0
    %p57 = scmp.lt.s32.totalorder %s56, 0
    %s58 = scalar_select %p57, %s56, 0
    %s59 = smul.u32 2, %s58
    %s60 = sadd.s32 0, 0
    %p61 = scmp.lt.s32.totalorder %s60, 0
    %s62 = scalar_select %p61, %s60, 0
    %s63 = smul.u32 2, %s62
    %p64 = scmp.eq.s32.totalorder 0, 0
    // Predicated region
    $region18: #{tpu_custom_call.1} parent=1 // pred_check
      %p65 = pneg %p64
    $region19: #{tpu_custom_call.1} parent=1 // pred_check_branch
      %67 = sbr.rel (%p65) target = $region21
    $region20: #{tpu_custom_call.1} parent=1 // pred_region
      %68 = vst [vmem:[#allocation7] sm:$0xff] 0.0
      %69 = vst [vmem:[#allocation7 + $0x8] sm:$0xff] 0.0
      %70 = vst [vmem:[#allocation7 + $0x10] sm:$0xff] 0.0
      %71 = vst [vmem:[#allocation7 + $0x18] sm:$0xff] 0.0
    $region21: #{tpu_custom_call.1} parent=1 // pred_fallthru
      _
    %v72 = vld [vmem:[#allocation2] sm:$0xff]
    %v73 = vld [vmem:[#allocation2 + $0x8] sm:$0xff]
    %v74 = vld [vmem:[#allocation5] sm:$0xff]
    %v75 = vld [vmem:[#allocation5 + $0x8] sm:$0xff]
    %v76 = vlog2.pop %v72
    %v77 = vmul.f32 %v76, 0.6931472
    %v78 = vlog2.pop %v73
    %v79 = vmul.f32 %v78, 0.6931472
    %v80 = vmax.f32 %v77, -100.0
    %v81 = vmax.f32 %v79, -100.0
    %v82 = vsub.f32 0.0, %v72
    %v83 = vsub.f32 0.0, %v73
    %v84 = vadd.f32 %v82, 1.0
    %v85 = vlog2.pop %v84
    %v86 = vmul.f32 %v85, 0.6931472
    %v87 = vmul.f32 -0.5, %v82
    %v88 = vadd.f32 %v87, 1.0
    %v89 = vmul.f32 %v88, %v82
    %v90 = vand.u32 2147483647, %v82
    %vm91 = vcmp.lt.f32.partialorder %v90, 0.0004427343
    %v92 = vsel %vm91, %v89, %v86
    %v93 = vadd.f32 %v83, 1.0
    %v94 = vlog2.pop %v93
    %v95 = vmul.f32 %v94, 0.6931472
    %v96 = vmul.f32 -0.5, %v83
    %v97 = vadd.f32 %v96, 1.0
    %v98 = vmul.f32 %v97, %v83
    %v99 = vand.u32 2147483647, %v83
    %vm100 = vcmp.lt.f32.partialorder %v99, 0.0004427343
    %v101 = vsel %vm100, %v98, %v95
    %v102 = vmax.f32 %v92, -100.0
    %v103 = vmax.f32 %v101, -100.0
    %v104 = vsub.f32 %v80, %v102
    %v105 = vsub.f32 %v81, %v103
    %v106 = vmul.f32 %v74, %v104
    %v107 = vmul.f32 %v75, %v105
    %v108 = vadd.f32 %v102, %v106
    %v109 = vadd.f32 %v103, %v107
    %v110 = vsub.f32 0.0, %v108
    %v111 = vsub.f32 0.0, %v109
    %v112 = vmul.f32 %v72, %v74
    %v113 = vmul.f32 %v73, %v75
    %v114 = vadd.f32 %v110, %v111
    %v115 = vadd.f32 %v112, %v113
    %v116 = vadd.f32 %v72, %v73
    %v117 = vadd.f32 %v74, %v75
    %v118 = vadd.f32 %v114, 0.0
    %v119 = vadd.f32 %v115, 0.0
    %v120 = vadd.f32 %v116, 0.0
    %v121 = vadd.f32 %v117, 0.0
    %v122 = vld [vmem:[#allocation7] sm:$0xff]
    %v123 = vadd.f32 %v122, %v118
    %124 = vst [vmem:[#allocation7] sm:$0xff] %v123
    %s125 = scalar_lea.vmem [#allocation7], 8
    %v126 = vld [vmem:[%s125] sm:$0xff]
    %v127 = vadd.f32 %v126, %v119
    %128 = vst [vmem:[%s125] sm:$0xff] %v127
    %s129 = scalar_lea.vmem [#allocation7], 16
    %v130 = vld [vmem:[%s129] sm:$0xff]
    %v131 = vadd.f32 %v130, %v120
    %132 = vst [vmem:[%s129] sm:$0xff] %v131
    %s133 = scalar_lea.vmem [#allocation7], 24
    %v134 = vld [vmem:[%s133] sm:$0xff]
    %v135 = vadd.f32 %v134, %v121
    %136 = vst [vmem:[%s133] sm:$0xff] %v135
    // Predicated region
    $region22: #{tpu_custom_call.1} parent=1 // pred_check
      _
    $region23: #{tpu_custom_call.1} parent=1 // pred_check_branch
      %138 = sbr.rel (0) target = $region25
    $region24: #{tpu_custom_call.1} parent=1 // pred_region
      %140 = vsyncadd [#allocation4], 0
      %s141 = sshll.u32 [#allocation7], 4
      %s142 = int_to_ptr.vmem [resolvable:$true] %s141
      %s143 = sshll.u32 %s2, 4
      %s144 = int_to_ptr.hbm [resolvable:$true] %s143
      %149 = dma.vmem_to_hbm [thread:$0]  %s142, 512, %s144, [#allocation4], 128, 128, 8
    $region25: #{tpu_custom_call.1} parent=1 // pred_fallthru
      _
    // Predicated region
    $region26: #{tpu_custom_call.1} parent=1 // pred_check
      _
    $region27: #{tpu_custom_call.1} parent=1 // pred_check_branch
      %151 = sbr.rel (0) target = $region29
    $region28: #{tpu_custom_call.1} parent=1 // pred_region
      %153 = dma.done [#allocation4], 512
    $region29: #{tpu_custom_call.1} parent=1 // pred_fallthru
      _
    %154 = vsyncpa [#allocation3], 1
    %155 = vsyncpa [#allocation6], 1
    %156 = vsyncpa [#allocation4], 1

</llo_original>
